<compile_context>
chip_gen: v7x
topology: tpu7x:2x2x1
jax: 0.10.0
libtpu: 0.0.40
codegen_flags: <defaults>
</compile_context>

<pallas_src>
import jax
import jax.numpy as jnp
from jax.experimental import pallas as pl
from jax.experimental.pallas import tpu as pltpu

# ---- problem sizes (consistent with the module's __init__ args) ----
BATCH = 8
PROJ_DIM = 32          # proj_dim
PRED_DIM = 32          # pred_dim
NUM_PROTOS = 16        # num_protos
TEMP = 0.1             # T
NUM_ITERS = 3          # Proto.__init__ hard-codes num_iters = 3
# TODO(synk): topk / predictor_target / self.outputs are stored on the module
# but never used in forward(); they are intentionally not materialized here.

_EPS = 1e-12           # F.normalize default eps
_TINY = 1e-30          # guard replacing remove_infs() on the Sinkhorn row sums

# ---- packed parameter slab layout (8-row-aligned sections, 32 lanes) ----
SLAB_W = 32
ROW_W1 = 0                          # rows [0,32):   w1^T  (PROJ, PRED)
ROW_B1 = ROW_W1 + PROJ_DIM          # row  32:       b1    (1, PRED)   (+7 pad)
ROW_W2 = ROW_B1 + 8                 # rows [40,72):  w2^T  (PRED, PROJ)
ROW_B2 = ROW_W2 + PRED_DIM          # row  72:       b2    (1, PROJ)   (+7 pad)
ROW_C = ROW_B2 + 8                  # rows [80,112): protos^T (PROJ, P)
SLAB_ROWS = ROW_C + PROJ_DIM        # 112


def proto_kernel(s_ref, t_ref, p_ref, zs_ref, zt_ref, loss_ref):
    B = BATCH
    s = s_ref[...]                                   # (B, PROJ)
    t = t_ref[...]                                   # (B, PROJ)

    # ---- normalize_protos(): prototypes packed as C^T (PROJ, P); normalize cols
    c_t = p_ref[ROW_C:ROW_C + PROJ_DIM, 0:NUM_PROTOS]
    c_ss = jnp.sum(c_t * c_t, axis=0, keepdims=True)             # (1, P)
    c_tn = c_t * jax.lax.rsqrt(jnp.maximum(c_ss, _EPS * _EPS))   # fused rsqrt

    # ---- predictor: Linear -> ReLU -> Linear (applied to s only) ----
    w1t = p_ref[ROW_W1:ROW_W1 + PROJ_DIM, 0:PRED_DIM]            # (PROJ, PRED)
    b1 = p_ref[ROW_B1:ROW_B1 + 1, 0:PRED_DIM]                    # (1, PRED)
    w2t = p_ref[ROW_W2:ROW_W2 + PRED_DIM, 0:PROJ_DIM]            # (PRED, PROJ)
    b2 = p_ref[ROW_B2:ROW_B2 + 1, 0:PROJ_DIM]                    # (1, PROJ)
    h = jnp.maximum(jnp.dot(s, w1t, preferred_element_type=jnp.float32) + b1, 0.0)
    s_pred = jnp.dot(h, w2t, preferred_element_type=jnp.float32) + b2

    # ---- fused L2 normalization of [s_pred ; t] and a single score matmul ----
    st_pre = jnp.concatenate([s_pred, t], axis=0)                # (2B, PROJ)
    ss = jnp.sum(st_pre * st_pre, axis=1, keepdims=True)
    sn_tn = st_pre * jax.lax.rsqrt(jnp.maximum(ss, _EPS * _EPS))
    scores = jnp.dot(sn_tn, c_tn, preferred_element_type=jnp.float32)  # (2B, P)
    scores_s = scores[0:B, :]
    scores_t = scores[B:2 * B, :]

    # ---- log_softmax(scores_s / T, dim=1) ----
    x = scores_s * jnp.float32(1.0 / TEMP)
    x_max = jnp.max(x, axis=1, keepdims=True)
    lse = jnp.log(jnp.sum(jnp.exp(x - x_max), axis=1, keepdims=True)) + x_max
    log_p_s = x - lse

    # ---- Sinkhorn on scores_t ----
    # torch works with Q of shape (P, B); we keep Qb = Q.T of shape (B, P) and
    # swap the reduction axes (mathematically identical).
    x_t = scores_t * jnp.float32(1.0 / TEMP)
    Qb = jnp.exp(x_t - jnp.max(x_t))          # <= 1 everywhere; remove_infs is a no-op
    Qb = Qb / jnp.sum(Qb, keepdims=True)      # global-sum normalization
    r = jnp.float32(1.0 / NUM_PROTOS)
    cc = jnp.float32(1.0 / B)
    for _ in range(NUM_ITERS):
        u = jnp.sum(Qb, axis=0, keepdims=True)            # Q row sums -> (1, P)
        Qb = Qb * (r / jnp.maximum(u, _TINY))             # cheap guard vs remove_infs
        col = jnp.sum(Qb, axis=1, keepdims=True)          # Q col sums -> (B, 1)
        Qb = Qb * (cc / col)
    q_t = Qb / jnp.sum(Qb, axis=1, keepdims=True)

    # ---- fused argmax prototype lookup (first-max tie-break, like torch.max) ----
    iota = jax.lax.broadcasted_iota(jnp.int32, (2 * B, NUM_PROTOS), 1)
    m = jnp.max(scores, axis=1, keepdims=True)
    idx = jnp.min(jnp.where(scores == m, iota, NUM_PROTOS), axis=1, keepdims=True)
    onehot = (iota == idx).astype(jnp.float32)            # (2B, P)
    # z[b, d] = sum_p onehot[b, p] * c_n[p, d]   (c_n = c_tn.T), contract P.
    z = jax.lax.dot_general(onehot, c_tn,
                            dimension_numbers=(((1,), (1,)), ((), ())),
                            preferred_element_type=jnp.float32)  # (2B, PROJ)
    zs_ref[...] = z[0:B, :]
    zt_ref[...] = z[B:2 * B, :]

    # loss = -(q_t * log_p_s).sum(dim=1).mean()  -> single fused reduction
    loss_ref[0] = -jnp.sum(q_t * log_p_s) * jnp.float32(1.0 / B)


def pack_params(w1, b1, w2, b2, protos_w):
    """One-time packing (hoisted out of the per-call path).

    w1: (PRED, PROJ), b1: (PRED,), w2: (PROJ, PRED), b2: (PROJ,) in torch
    Linear (out, in) layout; protos_w: (P, PROJ).
    """
    slab = jnp.zeros((SLAB_ROWS, SLAB_W), jnp.float32)
    slab = slab.at[ROW_W1:ROW_W1 + PROJ_DIM, 0:PRED_DIM].set(
        jnp.asarray(w1, jnp.float32).T)
    slab = slab.at[ROW_B1, 0:PRED_DIM].set(jnp.asarray(b1, jnp.float32))
    slab = slab.at[ROW_W2:ROW_W2 + PRED_DIM, 0:PROJ_DIM].set(
        jnp.asarray(w2, jnp.float32).T)
    slab = slab.at[ROW_B2, 0:PROJ_DIM].set(jnp.asarray(b2, jnp.float32))
    slab = slab.at[ROW_C:ROW_C + PROJ_DIM, 0:NUM_PROTOS].set(
        jnp.asarray(protos_w, jnp.float32).T)
    return slab


_VMEM = pl.BlockSpec(memory_space=pltpu.MemorySpace.VMEM)
_SMEM = pl.BlockSpec(memory_space=pltpu.MemorySpace.SMEM)


@jax.jit
def proto_forward(s, t, params_slab):
    """Single forward (module-equivalent). s, t: (B, proj_dim) f32.

    Returns (z_s (B, proj_dim), z_t (B, proj_dim), loss (1,)).
    No wrapper-side data ops: everything happens inside one pallas_call.
    """
    return pl.pallas_call(
        proto_kernel,
        out_shape=(
            jax.ShapeDtypeStruct((BATCH, PROJ_DIM), jnp.float32),
            jax.ShapeDtypeStruct((BATCH, PROJ_DIM), jnp.float32),
            jax.ShapeDtypeStruct((1,), jnp.float32),
        ),
        in_specs=[_VMEM, _VMEM, _VMEM],
        out_specs=(_VMEM, _VMEM, _SMEM),
    )(s, t, params_slab)


@jax.jit
def proto_forward_batched(s, t, params_slab):
    """N independent forwards under a 1-D grid. s, t: (N, B, proj_dim) f32.

    The packed parameter slab is DMA'd once and stays resident across grid
    steps; the grid axis is marked "parallel" (sharded across v7x's 2 TCs).
    Returns (z_s (N,B,D), z_t (N,B,D), loss (N,1)).
    """
    n = s.shape[0]
    z_spec = pl.BlockSpec((None, BATCH, PROJ_DIM), lambda i: (i, 0, 0))
    grid_spec = pltpu.PrefetchScalarGridSpec(
        num_scalar_prefetch=0,
        grid=(n,),
        in_specs=[
            pl.BlockSpec((None, BATCH, PROJ_DIM), lambda i: (i, 0, 0)),   # s
            pl.BlockSpec((None, BATCH, PROJ_DIM), lambda i: (i, 0, 0)),   # t
            pl.BlockSpec((SLAB_ROWS, SLAB_W), lambda i: (0, 0)),          # params (resident)
        ],
        out_specs=(
            z_spec,                                                       # z_s
            pl.BlockSpec((None, BATCH, PROJ_DIM), lambda i: (i, 0, 0)),   # z_t
            pl.BlockSpec((None, 1), lambda i: (i, 0),
                         memory_space=pltpu.MemorySpace.SMEM),            # loss
        ),
    )
    return pl.pallas_call(
        proto_kernel,
        out_shape=(
            jax.ShapeDtypeStruct((n, BATCH, PROJ_DIM), jnp.float32),
            jax.ShapeDtypeStruct((n, BATCH, PROJ_DIM), jnp.float32),
            jax.ShapeDtypeStruct((n, 1), jnp.float32),
        ),
        grid_spec=grid_spec,
        compiler_params=pltpu.CompilerParams(
            dimension_semantics=("parallel",)),
    )(s, t, params_slab)


def proto_reference(s, t, w1, b1, w2, b2, protos_w):
    """Pure-JAX reference of Proto.forward (high-precision matmuls)."""
    hp = jax.lax.Precision.HIGHEST
    c = protos_w / jnp.maximum(
        jnp.linalg.norm(protos_w, axis=1, keepdims=True), _EPS)
    h = jnp.maximum(jnp.dot(s, w1.T, precision=hp) + b1, 0.0)
    sp = jnp.dot(h, w2.T, precision=hp) + b2
    sn = sp / jnp.maximum(jnp.linalg.norm(sp, axis=1, keepdims=True), _EPS)
    tn = t / jnp.maximum(jnp.linalg.norm(t, axis=1, keepdims=True), _EPS)
    scores_s = jnp.dot(sn, c.T, precision=hp)
    scores_t = jnp.dot(tn, c.T, precision=hp)
    x = scores_s / TEMP
    log_p = x - jax.scipy.special.logsumexp(x, axis=1, keepdims=True)
    Q = jnp.exp((scores_t / TEMP) - jnp.max(scores_t / TEMP)).T    # (P, B)
    Q = Q / jnp.sum(Q)
    r = 1.0 / NUM_PROTOS
    cc = 1.0 / BATCH
    for _ in range(NUM_ITERS):
        Q = Q * (r / jnp.sum(Q, axis=1, keepdims=True))
        Q = Q * (cc / jnp.sum(Q, axis=0, keepdims=True))
    Q = Q / jnp.sum(Q, axis=0, keepdims=True)
    q_t = Q.T
    loss = -jnp.mean(jnp.sum(q_t * log_p, axis=1))
    z_s = c[jnp.argmax(scores_s, axis=1)]
    z_t = c[jnp.argmax(scores_t, axis=1)]
    return z_s, z_t, loss, c


if __name__ == "__main__":
    key = jax.random.PRNGKey(0)
    ks = jax.random.split(key, 9)

    # deterministic synthetic parameters (shapes from Proto.__init__)
    w1 = jax.random.normal(ks[0], (PRED_DIM, PROJ_DIM), jnp.float32) * 0.2
    b1 = jax.random.normal(ks[1], (PRED_DIM,), jnp.float32) * 0.05
    w2 = jax.random.normal(ks[2], (PROJ_DIM, PRED_DIM), jnp.float32) * 0.2
    b2 = jax.random.normal(ks[3], (PROJ_DIM,), jnp.float32) * 0.05
    protos_w = jax.random.normal(ks[4], (NUM_PROTOS, PROJ_DIM), jnp.float32)

    # inputs (already-projected embeddings s and target embeddings t)
    s = jax.random.normal(ks[5], (BATCH, PROJ_DIM), jnp.float32)
    t = jax.random.normal(ks[6], (BATCH, PROJ_DIM), jnp.float32)

    params = pack_params(w1, b1, w2, b2, protos_w)     # one-time packing

    # ---- single forward (module-equivalent call) ----
    z_s, z_t, loss = proto_forward(s, t, params)
    jax.block_until_ready((z_s, z_t, loss))

    assert z_s.shape == (BATCH, PROJ_DIM) and z_t.shape == (BATCH, PROJ_DIM)
    assert loss.shape == (1,)
    assert bool(jnp.isfinite(loss[0])) and bool(jnp.all(jnp.isfinite(z_s))) \
        and bool(jnp.all(jnp.isfinite(z_t)))

    ref_zs, ref_zt, ref_loss, c_n = proto_reference(s, t, w1, b1, w2, b2, protos_w)
    # exact division / rsqrt in-kernel -> tolerance limited only by MXU matmul
    # rounding; 2% is comfortably safe on all of v5e/v6e/v7x.
    assert abs(float(loss[0]) - float(ref_loss)) < 2e-2 + 2e-2 * abs(float(ref_loss)), \
        (float(loss[0]), float(ref_loss))

    def _rows_are_protos(z):
        d = jnp.max(jnp.abs(z[:, None, :] - c_n[None, :, :]), axis=-1)  # (B, P)
        return bool(jnp.all(jnp.min(d, axis=1) < 5e-3))

    assert _rows_are_protos(z_s) and _rows_are_protos(z_t)

    # ---- batched forwards under a 1-D "parallel" grid (params resident) ----
    N = 4
    s_b = jax.random.normal(ks[7], (N, BATCH, PROJ_DIM), jnp.float32)
    t_b = jax.random.normal(ks[8], (N, BATCH, PROJ_DIM), jnp.float32)
    zb_s, zb_t, loss_b = proto_forward_batched(s_b, t_b, params)
    jax.block_until_ready((zb_s, zb_t, loss_b))

    assert zb_s.shape == (N, BATCH, PROJ_DIM) and zb_t.shape == (N, BATCH, PROJ_DIM)
    assert loss_b.shape == (N, 1)
    for i in range(N):
        r_zs, r_zt, r_loss, _ = proto_reference(
            s_b[i], t_b[i], w1, b1, w2, b2, protos_w)
        assert abs(float(loss_b[i, 0]) - float(r_loss)) \
            < 2e-2 + 2e-2 * abs(float(r_loss)), (i, float(loss_b[i, 0]), float(r_loss))
        assert _rows_are_protos(zb_s[i]) and _rows_are_protos(zb_t[i])

    print("KERNEL_OK")
</pallas_src>

<mosaic_0001>
module attributes {stable_mosaic.version = 11 : i64} {
  func.func @proto_kernel(%arg0: memref<8x32xf32, #tpu.memory_space<vmem>>, %arg1: memref<8x32xf32, #tpu.memory_space<vmem>>, %arg2: memref<112x32xf32, #tpu.memory_space<vmem>>, %arg3: memref<8x32xf32, #tpu.memory_space<vmem>>, %arg4: memref<8x32xf32, #tpu.memory_space<vmem>>, %arg5: memref<1xf32, #tpu.memory_space<smem>>) attributes {dimension_semantics = [], scalar_prefetch = 0 : i64, scratch_operands = 0 : i64, tpu.core_type = #tpu.core_type<tc>} {
    %c0 = arith.constant 0 : index
    %c0_0 = arith.constant 0 : index
    %0 = vector.load %arg0[%c0, %c0_0] : memref<8x32xf32, #tpu.memory_space<vmem>>, vector<8x32xf32>
    %c0_1 = arith.constant 0 : index
    %c0_2 = arith.constant 0 : index
    %1 = vector.load %arg1[%c0_1, %c0_2] : memref<8x32xf32, #tpu.memory_space<vmem>>, vector<8x32xf32>
    %c80 = arith.constant 80 : index
    %c0_3 = arith.constant 0 : index
    %2 = vector.load %arg2[%c80, %c0_3] : memref<112x32xf32, #tpu.memory_space<vmem>>, vector<32x16xf32>
    %3 = arith.mulf %2, %2 : vector<32x16xf32>
    %cst = arith.constant dense<0.000000e+00> : vector<16xf32>
    %4 = vector.multi_reduction <add>, %3, %cst [0] : vector<32x16xf32> to vector<16xf32>
    %5 = vector.shape_cast %4 : vector<16xf32> to vector<1x16xf32>
    %cst_4 = arith.constant 1.000000e-24 : f32
    %6 = vector.broadcast %cst_4 : f32 to vector<1x16xf32>
    %7 = arith.maximumf %5, %6 : vector<1x16xf32>
    %8 = math.rsqrt %7 : vector<1x16xf32>
    %9 = vector.broadcast %8 : vector<1x16xf32> to vector<32x16xf32>
    %10 = arith.mulf %2, %9 : vector<32x16xf32>
    %c0_5 = arith.constant 0 : index
    %c0_6 = arith.constant 0 : index
    %11 = vector.load %arg2[%c0_5, %c0_6] : memref<112x32xf32, #tpu.memory_space<vmem>>, vector<32x32xf32>
    %c32 = arith.constant 32 : index
    %c0_7 = arith.constant 0 : index
    %12 = vector.load %arg2[%c32, %c0_7] : memref<112x32xf32, #tpu.memory_space<vmem>>, vector<1x32xf32>
    %c40 = arith.constant 40 : index
    %c0_8 = arith.constant 0 : index
    %13 = vector.load %arg2[%c40, %c0_8] : memref<112x32xf32, #tpu.memory_space<vmem>>, vector<32x32xf32>
    %c72 = arith.constant 72 : index
    %c0_9 = arith.constant 0 : index
    %14 = vector.load %arg2[%c72, %c0_9] : memref<112x32xf32, #tpu.memory_space<vmem>>, vector<1x32xf32>
    %cst_10 = arith.constant dense<0.000000e+00> : vector<8x32xf32>
    %15 = tpu.matmul %0, %11, %cst_10 {dimension_numbers = #tpu.dot_dimension_numbers<[1], [0], [0], [1], [0, 0, 1, 1], [], []>} : vector<8x32xf32>, vector<32x32xf32>, vector<8x32xf32> -> vector<8x32xf32>
    %16 = vector.broadcast %12 : vector<1x32xf32> to vector<8x32xf32>
    %17 = arith.addf %15, %16 : vector<8x32xf32>
    %cst_11 = arith.constant 0.000000e+00 : f32
    %18 = vector.broadcast %cst_11 : f32 to vector<8x32xf32>
    %19 = arith.maximumf %17, %18 : vector<8x32xf32>
    %cst_12 = arith.constant dense<0.000000e+00> : vector<8x32xf32>
    %20 = tpu.matmul %19, %13, %cst_12 {dimension_numbers = #tpu.dot_dimension_numbers<[1], [0], [0], [1], [0, 0, 1, 1], [], []>} : vector<8x32xf32>, vector<32x32xf32>, vector<8x32xf32> -> vector<8x32xf32>
    %21 = vector.broadcast %14 : vector<1x32xf32> to vector<8x32xf32>
    %22 = arith.addf %20, %21 : vector<8x32xf32>
    %23 = tpu.concatenate %22, %1 in 0 : vector<8x32xf32>, vector<8x32xf32> -> vector<16x32xf32>
    %24 = arith.mulf %23, %23 : vector<16x32xf32>
    %cst_13 = arith.constant dense<0.000000e+00> : vector<16xf32>
    %25 = vector.multi_reduction <add>, %24, %cst_13 [1] : vector<16x32xf32> to vector<16xf32>
    %26 = vector.shape_cast %25 : vector<16xf32> to vector<16x1xf32>
    %cst_14 = arith.constant 1.000000e-24 : f32
    %27 = vector.broadcast %cst_14 : f32 to vector<16x1xf32>
    %28 = arith.maximumf %26, %27 : vector<16x1xf32>
    %29 = math.rsqrt %28 : vector<16x1xf32>
    %30 = vector.broadcast %29 : vector<16x1xf32> to vector<16x32xf32>
    %31 = arith.mulf %23, %30 : vector<16x32xf32>
    %cst_15 = arith.constant dense<0.000000e+00> : vector<16x16xf32>
    %32 = tpu.matmul %31, %10, %cst_15 {dimension_numbers = #tpu.dot_dimension_numbers<[1], [0], [0], [1], [0, 0, 1, 1], [], []>} : vector<16x32xf32>, vector<32x16xf32>, vector<16x16xf32> -> vector<16x16xf32>
    %33 = vector.extract_strided_slice %32 {offsets = [0, 0], sizes = [8, 16], strides = [1, 1]} : vector<16x16xf32> to vector<8x16xf32>
    %34 = vector.extract_strided_slice %32 {offsets = [8, 0], sizes = [8, 16], strides = [1, 1]} : vector<16x16xf32> to vector<8x16xf32>
    %cst_16 = arith.constant 1.000000e+01 : f32
    %35 = vector.broadcast %cst_16 : f32 to vector<8x16xf32>
    %36 = arith.mulf %33, %35 : vector<8x16xf32>
    %cst_17 = arith.constant dense<0xFF800000> : vector<8xf32>
    %37 = vector.multi_reduction <maximumf>, %36, %cst_17 [1] : vector<8x16xf32> to vector<8xf32>
    %38 = vector.shape_cast %37 : vector<8xf32> to vector<8x1xf32>
    %39 = vector.broadcast %38 : vector<8x1xf32> to vector<8x16xf32>
    %40 = arith.subf %36, %39 : vector<8x16xf32>
    %41 = math.exp %40 : vector<8x16xf32>
    %cst_18 = arith.constant dense<0.000000e+00> : vector<8xf32>
    %42 = vector.multi_reduction <add>, %41, %cst_18 [1] : vector<8x16xf32> to vector<8xf32>
    %43 = vector.shape_cast %42 : vector<8xf32> to vector<8x1xf32>
    %44 = math.log %43 : vector<8x1xf32>
    %45 = arith.addf %44, %38 : vector<8x1xf32>
    %46 = vector.broadcast %45 : vector<8x1xf32> to vector<8x16xf32>
    %47 = arith.subf %36, %46 : vector<8x16xf32>
    %cst_19 = arith.constant 1.000000e+01 : f32
    %48 = vector.broadcast %cst_19 : f32 to vector<8x16xf32>
    %49 = arith.mulf %34, %48 : vector<8x16xf32>
    %50 = vector.shape_cast %49 : vector<8x16xf32> to vector<1x8x16xf32>
    %cst_20 = arith.constant dense<0xFF800000> : vector<1xf32>
    %51 = vector.multi_reduction <maximumf>, %50, %cst_20 [1, 2] : vector<1x8x16xf32> to vector<1xf32>
    %52 = vector.shape_cast %51 : vector<1xf32> to vector<1x1x1xf32>
    %53 = vector.extract %52[0, 0, 0] : f32 from vector<1x1x1xf32>
    %54 = vector.broadcast %53 : f32 to vector<8x16xf32>
    %55 = arith.subf %49, %54 : vector<8x16xf32>
    %56 = math.exp %55 : vector<8x16xf32>
    %57 = vector.shape_cast %56 : vector<8x16xf32> to vector<1x8x16xf32>
    %cst_21 = arith.constant dense<0.000000e+00> : vector<1xf32>
    %58 = vector.multi_reduction <add>, %57, %cst_21 [1, 2] : vector<1x8x16xf32> to vector<1xf32>
    %59 = vector.shape_cast %58 : vector<1xf32> to vector<1x1x1xf32>
    %60 = vector.extract %59[0, 0, 0] : f32 from vector<1x1x1xf32>
    %61 = vector.broadcast %60 : f32 to vector<1x1xf32>
    %62 = vector.broadcast %61 : vector<1x1xf32> to vector<8x16xf32>
    %63 = arith.divf %56, %62 : vector<8x16xf32>
    %cst_22 = arith.constant dense<0.000000e+00> : vector<16xf32>
    %64 = vector.multi_reduction <add>, %63, %cst_22 [0] : vector<8x16xf32> to vector<16xf32>
    %65 = vector.shape_cast %64 : vector<16xf32> to vector<1x16xf32>
    %cst_23 = arith.constant 1.000000e-30 : f32
    %66 = vector.broadcast %cst_23 : f32 to vector<1x16xf32>
    %67 = arith.maximumf %65, %66 : vector<1x16xf32>
    %cst_24 = arith.constant 6.250000e-02 : f32
    %68 = vector.broadcast %cst_24 : f32 to vector<1x16xf32>
    %69 = arith.divf %68, %67 : vector<1x16xf32>
    %70 = vector.broadcast %69 : vector<1x16xf32> to vector<8x16xf32>
    %71 = arith.mulf %63, %70 : vector<8x16xf32>
    %cst_25 = arith.constant dense<0.000000e+00> : vector<8xf32>
    %72 = vector.multi_reduction <add>, %71, %cst_25 [1] : vector<8x16xf32> to vector<8xf32>
    %73 = vector.shape_cast %72 : vector<8xf32> to vector<8x1xf32>
    %cst_26 = arith.constant 1.250000e-01 : f32
    %74 = vector.broadcast %cst_26 : f32 to vector<8x1xf32>
    %75 = arith.divf %74, %73 : vector<8x1xf32>
    %76 = vector.broadcast %75 : vector<8x1xf32> to vector<8x16xf32>
    %77 = arith.mulf %71, %76 : vector<8x16xf32>
    %cst_27 = arith.constant dense<0.000000e+00> : vector<16xf32>
    %78 = vector.multi_reduction <add>, %77, %cst_27 [0] : vector<8x16xf32> to vector<16xf32>
    %79 = vector.shape_cast %78 : vector<16xf32> to vector<1x16xf32>
    %cst_28 = arith.constant 1.000000e-30 : f32
    %80 = vector.broadcast %cst_28 : f32 to vector<1x16xf32>
    %81 = arith.maximumf %79, %80 : vector<1x16xf32>
    %cst_29 = arith.constant 6.250000e-02 : f32
    %82 = vector.broadcast %cst_29 : f32 to vector<1x16xf32>
    %83 = arith.divf %82, %81 : vector<1x16xf32>
    %84 = vector.broadcast %83 : vector<1x16xf32> to vector<8x16xf32>
    %85 = arith.mulf %77, %84 : vector<8x16xf32>
    %cst_30 = arith.constant dense<0.000000e+00> : vector<8xf32>
    %86 = vector.multi_reduction <add>, %85, %cst_30 [1] : vector<8x16xf32> to vector<8xf32>
    %87 = vector.shape_cast %86 : vector<8xf32> to vector<8x1xf32>
    %cst_31 = arith.constant 1.250000e-01 : f32
    %88 = vector.broadcast %cst_31 : f32 to vector<8x1xf32>
    %89 = arith.divf %88, %87 : vector<8x1xf32>
    %90 = vector.broadcast %89 : vector<8x1xf32> to vector<8x16xf32>
    %91 = arith.mulf %85, %90 : vector<8x16xf32>
    %cst_32 = arith.constant dense<0.000000e+00> : vector<16xf32>
    %92 = vector.multi_reduction <add>, %91, %cst_32 [0] : vector<8x16xf32> to vector<16xf32>
    %93 = vector.shape_cast %92 : vector<16xf32> to vector<1x16xf32>
    %cst_33 = arith.constant 1.000000e-30 : f32
    %94 = vector.broadcast %cst_33 : f32 to vector<1x16xf32>
    %95 = arith.maximumf %93, %94 : vector<1x16xf32>
    %cst_34 = arith.constant 6.250000e-02 : f32
    %96 = vector.broadcast %cst_34 : f32 to vector<1x16xf32>
    %97 = arith.divf %96, %95 : vector<1x16xf32>
    %98 = vector.broadcast %97 : vector<1x16xf32> to vector<8x16xf32>
    %99 = arith.mulf %91, %98 : vector<8x16xf32>
    %cst_35 = arith.constant dense<0.000000e+00> : vector<8xf32>
    %100 = vector.multi_reduction <add>, %99, %cst_35 [1] : vector<8x16xf32> to vector<8xf32>
    %101 = vector.shape_cast %100 : vector<8xf32> to vector<8x1xf32>
    %cst_36 = arith.constant 1.250000e-01 : f32
    %102 = vector.broadcast %cst_36 : f32 to vector<8x1xf32>
    %103 = arith.divf %102, %101 : vector<8x1xf32>
    %104 = vector.broadcast %103 : vector<8x1xf32> to vector<8x16xf32>
    %105 = arith.mulf %99, %104 : vector<8x16xf32>
    %cst_37 = arith.constant dense<0.000000e+00> : vector<8xf32>
    %106 = vector.multi_reduction <add>, %105, %cst_37 [1] : vector<8x16xf32> to vector<8xf32>
    %107 = vector.shape_cast %106 : vector<8xf32> to vector<8x1xf32>
    %108 = vector.broadcast %107 : vector<8x1xf32> to vector<8x16xf32>
    %109 = arith.divf %105, %108 : vector<8x16xf32>
    %110 = tpu.iota {dimensions = array<i32: 1>} : vector<16x16xi32>
    %cst_38 = arith.constant dense<0xFF800000> : vector<16xf32>
    %111 = vector.multi_reduction <maximumf>, %32, %cst_38 [1] : vector<16x16xf32> to vector<16xf32>
    %112 = vector.shape_cast %111 : vector<16xf32> to vector<16x1xf32>
    %113 = vector.broadcast %112 : vector<16x1xf32> to vector<16x16xf32>
    %114 = arith.cmpf oeq, %32, %113 : vector<16x16xf32>
    %c16_i32 = arith.constant 16 : i32
    %115 = vector.broadcast %c16_i32 : i32 to vector<16x16xi32>
    %116 = arith.select %114, %110, %115 : vector<16x16xi1>, vector<16x16xi32>
    %cst_39 = arith.constant dense<2147483647> : vector<16xi32>
    %117 = vector.multi_reduction <minsi>, %116, %cst_39 [1] : vector<16x16xi32> to vector<16xi32>
    %118 = vector.shape_cast %117 : vector<16xi32> to vector<16x1xi32>
    %119 = vector.broadcast %118 : vector<16x1xi32> to vector<16x16xi32>
    %120 = arith.cmpi eq, %110, %119 : vector<16x16xi32>
    %121 = arith.extui %120 : vector<16x16xi1> to vector<16x16xi32>
    %122 = arith.sitofp %121 : vector<16x16xi32> to vector<16x16xf32>
    %cst_40 = arith.constant dense<0.000000e+00> : vector<16x32xf32>
    %123 = tpu.matmul %122, %10, %cst_40 {dimension_numbers = #tpu.dot_dimension_numbers<[1], [1], [0], [0], [0, 0, 1, 0], [], []>} : vector<16x16xf32>, vector<32x16xf32>, vector<16x32xf32> -> vector<16x32xf32>
    %124 = vector.extract_strided_slice %123 {offsets = [0, 0], sizes = [8, 32], strides = [1, 1]} : vector<16x32xf32> to vector<8x32xf32>
    %c0_41 = arith.constant 0 : index
    %c0_42 = arith.constant 0 : index
    %125 = vector.load %arg3[%c0_41, %c0_42] : memref<8x32xf32, #tpu.memory_space<vmem>>, vector<8x32xf32>
    tpu.vector_store %arg3[%c0_41, %c0_42], %124 {strides = array<i32>} : memref<8x32xf32, #tpu.memory_space<vmem>>, vector<8x32xf32>,
    %126 = vector.extract_strided_slice %123 {offsets = [8, 0], sizes = [8, 32], strides = [1, 1]} : vector<16x32xf32> to vector<8x32xf32>
    %c0_43 = arith.constant 0 : index
    %c0_44 = arith.constant 0 : index
    %127 = vector.load %arg4[%c0_43, %c0_44] : memref<8x32xf32, #tpu.memory_space<vmem>>, vector<8x32xf32>
    tpu.vector_store %arg4[%c0_43, %c0_44], %126 {strides = array<i32>} : memref<8x32xf32, #tpu.memory_space<vmem>>, vector<8x32xf32>,
    %128 = arith.mulf %109, %47 : vector<8x16xf32>
    %129 = vector.shape_cast %128 : vector<8x16xf32> to vector<1x8x16xf32>
    %cst_45 = arith.constant dense<0.000000e+00> : vector<1xf32>
    %130 = vector.multi_reduction <add>, %129, %cst_45 [1, 2] : vector<1x8x16xf32> to vector<1xf32>
    %131 = vector.shape_cast %130 : vector<1xf32> to vector<1x1x1xf32>
    %132 = vector.extract %131[0, 0, 0] : f32 from vector<1x1x1xf32>
    %cst_46 = arith.constant 0.000000e+00 : f32
    %133 = arith.subf %cst_46, %132 : f32
    %cst_47 = arith.constant 1.250000e-01 : f32
    %134 = arith.mulf %133, %cst_47 : f32
    %c0_48 = arith.constant 0 : index
    %135 = memref.load %arg5[%c0_48] : memref<1xf32, #tpu.memory_space<smem>>
    memref.store %134, %arg5[%c0_48] : memref<1xf32, #tpu.memory_space<smem>>
    return
  }
}

</mosaic_0001>

<llo_original>
// kernel: proto_forward.1
$region0: #{proto_forward.1}
  #allocation0 [shape = 'u32[]', space=smem, size = 0x4, offset = 0x4, fixed_abs, tag = 'smem constant byte address 0x4 - core index']
  #allocation1 [shape = 'u32[144,128]{1,0:T(1,128)}', space=vmem, size = 0x12000, scoped, tag = 'internal scratch']
  %s0 = inlined_call_operand.vmem [shape: f32[8,32], index: 0, kind: input, shape index: {}]
  %s1 = inlined_call_operand.vmem [shape: f32[8,32], index: 1, kind: input, shape index: {}]
  %s2 = inlined_call_operand.vmem [shape: f32[112,32], index: 2, kind: input, shape index: {}]
  %s3 = inlined_call_operand.hbm [shape: f32[8,32], index: 3, kind: output, shape index: {0}]
  %s4 = inlined_call_operand.hbm [shape: f32[8,32], index: 4, kind: output, shape index: {1}]
  %s5 = inlined_call_operand.hbm [shape: f32[1], index: 5, kind: output, shape index: {2}]
  %6 = xla_tuple %s3, %s4, %s5
  %s7 = sld [smem:[#allocation0]]
  $region38: #{proto_forward.1} parent=0
    _
  %s9 = ssub.s32 1, %s7
  %s10 = scalar_select 0, %s9, %s7
  $region1: #{proto_forward.1} parent=0
    #allocation2 [shape = 'u8[4096]{0}', space=vmem, size = 0x1000, scoped, tag = 'output window, operand 0, single buffered']
    #allocation3 [shape = 's32[1]{0}', space=sflag, size = 0x4, scoped, tag = 'scoped memory for proto_forward.1']
    #allocation4 [shape = 's32[1]{0}', space=sflag, size = 0x4, scoped, tag = 'scoped memory for proto_forward.1']
    #allocation5 [shape = 'u8[4096]{0}', space=vmem, size = 0x1000, scoped, tag = 'output window, operand 1, single buffered']
    #allocation6 [shape = 's32[1]{0}', space=sflag, size = 0x4, scoped, tag = 'scoped memory for proto_forward.1']
    #allocation7 [shape = 'u8[512]{0}', space=smem, size = 0x200, scoped, tag = 'output window, operand 2, single buffered']
    %11 = vsyncpa [#allocation3], 0
    %12 = vsyncpa [#allocation6], 0
    %13 = vsyncpa [#allocation4], 0
    // Predicated region
    $region2: #{proto_forward.1} parent=1 // pred_check
      _
    $region3: #{proto_forward.1} parent=1 // pred_check_branch
      %15 = sbr.rel (0) target = $region5
    $region4: #{proto_forward.1} parent=1 // pred_region
      _
    $region5: #{proto_forward.1} parent=1 // pred_fallthru
      _
    // Predicated region
    $region6: #{proto_forward.1} parent=1 // pred_check
      _
    $region7: #{proto_forward.1} parent=1 // pred_check_branch
      %17 = sbr.rel (0) target = $region9
    $region8: #{proto_forward.1} parent=1 // pred_region
      _
    $region9: #{proto_forward.1} parent=1 // pred_fallthru
      _
    // Predicated region
    $region10: #{proto_forward.1} parent=1 // pred_check
      _
    $region11: #{proto_forward.1} parent=1 // pred_check_branch
      %19 = sbr.rel (0) target = $region13
    $region12: #{proto_forward.1} parent=1 // pred_region
      _
    $region13: #{proto_forward.1} parent=1 // pred_fallthru
      _
    %v20 = vld [vmem:[%s0] sm:$0xff]
    %v21 = vld [vmem:[%s1] sm:$0xff]
    %v22 = vld [vmem:[%s2 + $0x50] sm:$0xff]
    %v23 = vld [vmem:[%s2 + $0x58] sm:$0xff]
    %v24 = vld [vmem:[%s2 + $0x60] sm:$0xff]
    %v25 = vld [vmem:[%s2 + $0x68] sm:$0xff]
    %v26 = vmul.f32 %v22, %v22
    %v27 = vmul.f32 %v23, %v23
    %v28 = vmul.f32 %v24, %v24
    %v29 = vmul.f32 %v25, %v25
    %vm30 = vcmask 130048
    %v31 = vsel %vm30, %v26, 0.0
    %v32 = vsel %vm30, %v27, 0.0
    %v33 = vadd.f32 %v31, %v32
    %v34 = vsel %vm30, %v28, 0.0
    %v35 = vadd.f32 %v33, %v34
    %v36 = vsel %vm30, %v29, 0.0
    %v37 = vadd.f32 %v35, %v36
    %v38 = vrot.slane %v37, 4
    %v39 = vadd.f32 %v37, %v38
    %v40 = vrot.slane %v39, 2
    %v41 = vadd.f32 %v39, %v40
    %v42 = vrot.slane %v41, 1
    %v43 = vadd.f32 %v41, %v42
    %v44 = vmax.f32 %v43, 1e-24
    %v45 = vrsqrt.pop %v44
    %v46 = vmul.f32 %v22, %v45
    %v47 = vmul.f32 %v23, %v45
    %v48 = vmul.f32 %v24, %v45
    %v49 = vmul.f32 %v25, %v45
    %v50 = vld [vmem:[%s2] sm:$0xff]
    %v51 = vld [vmem:[%s2 + $0x8] sm:$0xff]
    %v52 = vld [vmem:[%s2 + $0x10] sm:$0xff]
    %v53 = vld [vmem:[%s2 + $0x18] sm:$0xff]
    %v54 = vld [vmem:[%s2 + $0x20] sm:$0x1]
    %v55 = vld [vmem:[%s2 + $0x28] sm:$0xff]
    %v56 = vld [vmem:[%s2 + $0x30] sm:$0xff]
    %v57 = vld [vmem:[%s2 + $0x38] sm:$0xff]
    %v58 = vld [vmem:[%s2 + $0x40] sm:$0xff]
    %v59 = vld [vmem:[%s2 + $0x48] sm:$0x1]
    %v60 = vlaneseq
    %v61 = vshrl.u32 %v60, 7
    %v62 = vsub.s32 0, %v61
    %v63 = vrot.slane %v54, %v62
    %vm64 = vcmask 261120
    %v66 = vsel %vm64, %v20, 0
    %68 = vmatprep.subr.mxu0 0.0
    %69 = vmatpush1.msra.mxu0 %v50
    %70 = vmatprep.subr.mxu0 0.0
    %71 = vmatpush1.msra.mxu0 %v51
    %72 = vmatprep.subr.mxu0 0.0
    %73 = vmatpush1.msra.mxu0 %v52
    %74 = vmatprep.subr.mxu0 0.0
    %75 = vmatpush1.msra.mxu0 %v53
    %76 = vmatprep.subr.mxu0 0.0
    %77 = vmatpush1.msra.mxu0 0.0
    %78 = vmatprep.subr.mxu0 0.0
    %79 = vmatpush1.msra.mxu0 0.0
    %80 = vmatprep.subr.mxu0 0.0
    %81 = vmatpush1.msra.mxu0 0.0
    %82 = vmatprep.subr.mxu0 0.0
    %83 = vmatpush1.msra.mxu0 0.0
    %84 = vmatprep.subr.mxu0 0.0
    %85 = vmatpush1.msra.mxu0 0.0
    %86 = vmatprep.subr.mxu0 0.0
    %87 = vmatpush1.msra.mxu0 0.0
    %88 = vmatprep.subr.mxu0 0.0
    %89 = vmatpush1.msra.mxu0 0.0
    %90 = vmatprep.subr.mxu0 0.0
    %91 = vmatpush1.msra.mxu0 0.0
    %92 = vmatprep.subr.mxu0 0.0
    %93 = vmatpush1.msra.mxu0 0.0
    %94 = vmatprep.subr.mxu0 0.0
    %95 = vmatpush1.msra.mxu0 0.0
    %96 = vmatprep.subr.mxu0 0.0
    %97 = vmatpush1.msra.mxu0 0.0
    %98 = vmatprep.subr.mxu0 0.0
    %99 = vmatpush1.msra.mxu0 0.0
    %100 = vmatprep.subr.mxu0 0.0
    %101 = vmatpush1.msra.mxu0 0.0
    %102 = vmatprep.subr.mxu0 0.0
    %103 = vmatpush1.msra.mxu0 0.0
    %104 = vmatprep.subr.mxu0 0.0
    %105 = vmatpush1.msra.mxu0 0.0
    %106 = vmatprep.subr.mxu0 0.0
    %107 = vmatpush1.msra.mxu0 0.0
    %108 = vmatprep.subr.mxu0 0.0
    %109 = vmatpush1.msra.mxu0 0.0
    %110 = vmatprep.subr.mxu0 0.0
    %111 = vmatpush1.msra.mxu0 0.0
    %112 = vmatprep.subr.mxu0 0.0
    %113 = vmatpush1.msra.mxu0 0.0
    %114 = vmatprep.subr.mxu0 0.0
    %115 = vmatpush1.msra.mxu0 0.0
    %116 = vmatprep.subr.mxu0 0.0
    %117 = vmatpush1.msra.mxu0 0.0
    %118 = vmatprep.subr.mxu0 0.0
    %119 = vmatpush1.msra.mxu0 0.0
    %120 = vmatprep.subr.mxu0 0.0
    %121 = vmatpush1.msra.mxu0 0.0
    %122 = vmatprep.subr.mxu0 0.0
    %123 = vmatpush1.msra.mxu0 0.0
    %124 = vmatprep.subr.mxu0 0.0
    %125 = vmatpush1.msra.mxu0 0.0
    %126 = vmatprep.subr.mxu0 0.0
    %127 = vmatpush1.msra.mxu0 0.0
    %128 = vmatprep.subr.mxu0 0.0
    %129 = vmatpush1.msra.mxu0 0.0
    %130 = vmatprep.subr.mxu0 0.0
    %131 = vmatpush1.msra.mxu0 0.0
    %132 = vmatprep.mubr.f32.mxu0 0.0
    %133 = vmatmul.mubr.f32.gmra.mrb[0].mxu0 %v66
    %v134 = vpop.f32.mrb[0].mxu0
    %v135 = vadd.f32 %v63, %v134
    %v136 = vpop.f32.mrb[0].mxu0
    %137 = vdwg.mxu0
    %v138 = vmax.f32 %v135, 0.0
    %v139 = vlaneseq
    %v140 = vshrl.u32 %v139, 7
    %v141 = vsub.s32 0, %v140
    %v142 = vrot.slane %v59, %v141
    %v144 = vsel %vm64, %v138, 0
    %146 = vmatprep.subr.mxu0 0.0
    %147 = vmatpush1.msra.mxu0 %v55
    %148 = vmatprep.subr.mxu0 0.0
    %149 = vmatpush1.msra.mxu0 %v56
    %150 = vmatprep.subr.mxu0 0.0
    %151 = vmatpush1.msra.mxu0 %v57
    %152 = vmatprep.subr.mxu0 0.0
    %153 = vmatpush1.msra.mxu0 %v58
    %154 = vmatprep.subr.mxu0 0.0
    %155 = vmatpush1.msra.mxu0 0.0
    %156 = vmatprep.subr.mxu0 0.0
    %157 = vmatpush1.msra.mxu0 0.0
    %158 = vmatprep.subr.mxu0 0.0
    %159 = vmatpush1.msra.mxu0 0.0
    %160 = vmatprep.subr.mxu0 0.0
    %161 = vmatpush1.msra.mxu0 0.0
    %162 = vmatprep.subr.mxu0 0.0
    %163 = vmatpush1.msra.mxu0 0.0
    %164 = vmatprep.subr.mxu0 0.0
    %165 = vmatpush1.msra.mxu0 0.0
    %166 = vmatprep.subr.mxu0 0.0
    %167 = vmatpush1.msra.mxu0 0.0
    %168 = vmatprep.subr.mxu0 0.0
    %169 = vmatpush1.msra.mxu0 0.0
    %170 = vmatprep.subr.mxu0 0.0
    %171 = vmatpush1.msra.mxu0 0.0
    %172 = vmatprep.subr.mxu0 0.0
    %173 = vmatpush1.msra.mxu0 0.0
    %174 = vmatprep.subr.mxu0 0.0
    %175 = vmatpush1.msra.mxu0 0.0
    %176 = vmatprep.subr.mxu0 0.0
    %177 = vmatpush1.msra.mxu0 0.0
    %178 = vmatprep.subr.mxu0 0.0
    %179 = vmatpush1.msra.mxu0 0.0
    %180 = vmatprep.subr.mxu0 0.0
    %181 = vmatpush1.msra.mxu0 0.0
    %182 = vmatprep.subr.mxu0 0.0
    %183 = vmatpush1.msra.mxu0 0.0
    %184 = vmatprep.subr.mxu0 0.0
    %185 = vmatpush1.msra.mxu0 0.0
    %186 = vmatprep.subr.mxu0 0.0
    %187 = vmatpush1.msra.mxu0 0.0
    %188 = vmatprep.subr.mxu0 0.0
    %189 = vmatpush1.msra.mxu0 0.0
    %190 = vmatprep.subr.mxu0 0.0
    %191 = vmatpush1.msra.mxu0 0.0
    %192 = vmatprep.subr.mxu0 0.0
    %193 = vmatpush1.msra.mxu0 0.0
    %194 = vmatprep.subr.mxu0 0.0
    %195 = vmatpush1.msra.mxu0 0.0
    %196 = vmatprep.subr.mxu0 0.0
    %197 = vmatpush1.msra.mxu0 0.0
    %198 = vmatprep.subr.mxu0 0.0
    %199 = vmatpush1.msra.mxu0 0.0
    %200 = vmatprep.subr.mxu0 0.0
    %201 = vmatpush1.msra.mxu0 0.0
    %202 = vmatprep.subr.mxu0 0.0
    %203 = vmatpush1.msra.mxu0 0.0
    %204 = vmatprep.subr.mxu0 0.0
    %205 = vmatpush1.msra.mxu0 0.0
    %206 = vmatprep.subr.mxu0 0.0
    %207 = vmatpush1.msra.mxu0 0.0
    %208 = vmatprep.subr.mxu0 0.0
    %209 = vmatpush1.msra.mxu0 0.0
    %210 = vmatprep.mubr.f32.mxu0 0.0
    %211 = vmatmul.mubr.f32.gmra.mrb[0].mxu0 %v144
    %v212 = vpop.f32.mrb[0].mxu0
    %v213 = vadd.f32 %v142, %v212
    %v214 = vpop.f32.mrb[0].mxu0
    %215 = vdwg.mxu0
    %v216 = vmul.f32 %v213, %v213
    %v217 = vmul.f32 %v21, %v21
    %v218 = vsel %vm64, %v216, 0.0
    %219 = vadd.xlane.f32.xlu0 %v218
    %v220 = vpop.xlane.xlu0 %219
    %v221 = vsel %vm64, %v217, 0.0
    %222 = vadd.xlane.f32.xlu0 %v221
    %v223 = vpop.xlane.xlu0 %222
    %v224 = vmax.f32 %v220, 1e-24
    %v225 = vmax.f32 %v223, 1e-24
    %v226 = vrsqrt.pop %v224
    %v227 = vrsqrt.pop %v225
    %v228 = vmul.f32 %v213, %v226
    %v229 = vmul.f32 %v21, %v227
    %v231 = vsel %vm64, %v228, 0
    %v234 = vsel %vm64, %v229, 0
    %236 = vmatprep.subr.mxu0 0.0
    %237 = vmatpush1.msra.mxu0 %v46
    %238 = vmatprep.subr.mxu0 0.0
    %239 = vmatpush1.msra.mxu0 %v47
    %240 = vmatprep.subr.mxu0 0.0
    %241 = vmatpush1.msra.mxu0 %v48
    %242 = vmatprep.subr.mxu0 0.0
    %243 = vmatpush1.msra.mxu0 %v49
    %244 = vmatprep.subr.mxu0 0.0
    %245 = vmatpush1.msra.mxu0 0.0
    %246 = vmatprep.subr.mxu0 0.0
    %247 = vmatpush1.msra.mxu0 0.0
    %248 = vmatprep.subr.mxu0 0.0
    %249 = vmatpush1.msra.mxu0 0.0
    %250 = vmatprep.subr.mxu0 0.0
    %251 = vmatpush1.msra.mxu0 0.0
    %252 = vmatprep.subr.mxu0 0.0
    %253 = vmatpush1.msra.mxu0 0.0
    %254 = vmatprep.subr.mxu0 0.0
    %255 = vmatpush1.msra.mxu0 0.0
    %256 = vmatprep.subr.mxu0 0.0
    %257 = vmatpush1.msra.mxu0 0.0
    %258 = vmatprep.subr.mxu0 0.0
    %259 = vmatpush1.msra.mxu0 0.0
    %260 = vmatprep.subr.mxu0 0.0
    %261 = vmatpush1.msra.mxu0 0.0
    %262 = vmatprep.subr.mxu0 0.0
    %263 = vmatpush1.msra.mxu0 0.0
    %264 = vmatprep.subr.mxu0 0.0
    %265 = vmatpush1.msra.mxu0 0.0
    %266 = vmatprep.subr.mxu0 0.0
    %267 = vmatpush1.msra.mxu0 0.0
    %268 = vmatprep.subr.mxu0 0.0
    %269 = vmatpush1.msra.mxu0 0.0
    %270 = vmatprep.subr.mxu0 0.0
    %271 = vmatpush1.msra.mxu0 0.0
    %272 = vmatprep.subr.mxu0 0.0
    %273 = vmatpush1.msra.mxu0 0.0
    %274 = vmatprep.subr.mxu0 0.0
    %275 = vmatpush1.msra.mxu0 0.0
    %276 = vmatprep.subr.mxu0 0.0
    %277 = vmatpush1.msra.mxu0 0.0
    %278 = vmatprep.subr.mxu0 0.0
    %279 = vmatpush1.msra.mxu0 0.0
    %280 = vmatprep.subr.mxu0 0.0
    %281 = vmatpush1.msra.mxu0 0.0
    %282 = vmatprep.subr.mxu0 0.0
    %283 = vmatpush1.msra.mxu0 0.0
    %284 = vmatprep.subr.mxu0 0.0
    %285 = vmatpush1.msra.mxu0 0.0
    %286 = vmatprep.subr.mxu0 0.0
    %287 = vmatpush1.msra.mxu0 0.0
    %288 = vmatprep.subr.mxu0 0.0
    %289 = vmatpush1.msra.mxu0 0.0
    %290 = vmatprep.subr.mxu0 0.0
    %291 = vmatpush1.msra.mxu0 0.0
    %292 = vmatprep.subr.mxu0 0.0
    %293 = vmatpush1.msra.mxu0 0.0
    %294 = vmatprep.subr.mxu0 0.0
    %295 = vmatpush1.msra.mxu0 0.0
    %296 = vmatprep.subr.mxu0 0.0
    %297 = vmatpush1.msra.mxu0 0.0
    %298 = vmatprep.subr.mxu0 0.0
    %299 = vmatpush1.msra.mxu0 0.0
    %300 = vmatprep.mubr.f32.mxu0 0.0
    %301 = vmatmul.mubr.f32.gmra.mrb[0].mxu0 %v231
    %v302 = vpop.f32.mrb[0].mxu0
    %v303 = vadd.f32 0.0, %v302
    %v304 = vpop.f32.mrb[0].mxu0
    %305 = vmatprep.mubr.f32.mxu0 0.0
    %306 = vmatmul.mubr.f32.gmra.mrb[0].mxu0 %v234
    %v307 = vpop.f32.mrb[0].mxu0
    %v308 = vadd.f32 0.0, %v307
    %v309 = vpop.f32.mrb[0].mxu0
    %310 = vdwg.mxu0
    %v311 = vmul.f32 %v303, 10.0
    %v312 = vsel %vm30, %v311, -inf
    %313 = vmax.xlane.f32.xlu0 %v312
    %v314 = vpop.xlane.xlu0 %313
    %v315 = vsub.f32 %v311, %v314
    %v316 = vmul.f32 %v315, 1.442695
    %v317 = vpow.pop %v316
    %v318 = vsel %vm30, %v317, 0.0
    %319 = vadd.xlane.f32.xlu0 %v318
    %v320 = vpop.xlane.xlu0 %319
    %v321 = vlog2.pop %v320
    %v322 = vmul.f32 %v321, 0.6931472
    %v323 = vadd.f32 %v322, %v314
    %v324 = vsub.f32 %v311, %v323
    %v325 = vmul.f32 %v308, 10.0
    %v326 = vsel %vm30, %v325, -inf
    %327 = vmax.xlane.f32.xlu0 %v326
    %v328 = vpop.xlane.xlu0 %327
    %v329 = vrot.slane %v328, 4
    %v330 = vmax.f32 %v328, %v329
    %v331 = vrot.slane %v330, 2
    %v332 = vmax.f32 %v330, %v331
    %v333 = vrot.slane %v332, 1
    %v334 = vmax.f32 %v332, %v333
    %s335 = vtos %v334
    %v336 = vstv %s335
    %v337 = vsub.f32 %v325, %v336
    %v338 = vmul.f32 %v337, 1.442695
    %v339 = vpow.pop %v338
    %v340 = vsel %vm30, %v339, 0.0
    %341 = vadd.xlane.f32.xlu0 %v340
    %v342 = vpop.xlane.xlu0 %341
    %v343 = vrot.slane %v342, 4
    %v344 = vadd.f32 %v342, %v343
    %v345 = vrot.slane %v344, 2
    %v346 = vadd.f32 %v344, %v345
    %v347 = vrot.slane %v346, 1
    %v348 = vadd.f32 %v346, %v347
    %s349 = vtos %v348
    %v350 = vstv %s349
    %v351 = vrcp.pop %v350
    %v352 = vmul.f32 %v339, %v351
    %v353 = vsel %vm30, %v352, 0.0
    %v354 = vrot.slane %v353, 4
    %v355 = vadd.f32 %v353, %v354
    %v356 = vrot.slane %v355, 2
    %v357 = vadd.f32 %v355, %v356
    %v358 = vrot.slane %v357, 1
    %v359 = vadd.f32 %v357, %v358
    %v360 = vmax.f32 %v359, 1e-30
    %v361 = vrcp.pop %v360
    %v362 = vmul.f32 0.0625, %v361
    %v363 = vmul.f32 %v352, %v362
    %v364 = vsel %vm30, %v363, 0.0
    %365 = vadd.xlane.f32.xlu0 %v364
    %v366 = vpop.xlane.xlu0 %365
    %v367 = vrcp.pop %v366
    %v368 = vmul.f32 0.125, %v367
    %v369 = vmul.f32 %v363, %v368
    %v370 = vsel %vm30, %v369, 0.0
    %v371 = vrot.slane %v370, 4
    %v372 = vadd.f32 %v370, %v371
    %v373 = vrot.slane %v372, 2
    %v374 = vadd.f32 %v372, %v373
    %v375 = vrot.slane %v374, 1
    %v376 = vadd.f32 %v374, %v375
    %v377 = vmax.f32 %v376, 1e-30
    %v378 = vrcp.pop %v377
    %v379 = vmul.f32 0.0625, %v378
    %v380 = vmul.f32 %v369, %v379
    %v381 = vsel %vm30, %v380, 0.0
    %382 = vadd.xlane.f32.xlu0 %v381
    %v383 = vpop.xlane.xlu0 %382
    %v384 = vrcp.pop %v383
    %v385 = vmul.f32 0.125, %v384
    %v386 = vmul.f32 %v380, %v385
    %v387 = vsel %vm30, %v386, 0.0
    %v388 = vrot.slane %v387, 4
    %v389 = vadd.f32 %v387, %v388
    %v390 = vrot.slane %v389, 2
    %v391 = vadd.f32 %v389, %v390
    %v392 = vrot.slane %v391, 1
    %v393 = vadd.f32 %v391, %v392
    %v394 = vmax.f32 %v393, 1e-30
    %v395 = vrcp.pop %v394
    %v396 = vmul.f32 0.0625, %v395
    %v397 = vmul.f32 %v386, %v396
    %v398 = vsel %vm30, %v397, 0.0
    %399 = vadd.xlane.f32.xlu0 %v398
    %v400 = vpop.xlane.xlu0 %399
    %v401 = vrcp.pop %v400
    %v402 = vmul.f32 0.125, %v401
    %v403 = vmul.f32 %v397, %v402
    %v404 = vsel %vm30, %v403, 0.0
    %405 = vadd.xlane.f32.xlu0 %v404
    %v406 = vpop.xlane.xlu0 %405
    %v407 = vrcp.pop %v406
    %v408 = vmul.f32 %v403, %v407
    %v409 = vlaneseq
    %v410 = vand.u32 %v409, 127
    %v411 = vsel %vm30, %v303, -inf
    %412 = vmax.xlane.f32.xlu0 %v411
    %v413 = vpop.xlane.xlu0 %412
    %v414 = vsel %vm30, %v308, -inf
    %415 = vmax.xlane.f32.xlu0 %v414
    %v416 = vpop.xlane.xlu0 %415
    %vm417 = vcmp.eq.f32.partialorder %v303, %v413
    %vm418 = vcmp.eq.f32.partialorder %v308, %v416
    %v419 = vsel %vm417, %v410, 16
    %v420 = vsel %vm418, %v410, 16
    %v421 = vsel %vm30, %v419, 2147483647
    %v422 = vand.u32 %v421, 65535
    %v423 = vshra.s32 %v421, 16
    %v424 = vcvt.s32.f32 %v422
    %v425 = vcvt.s32.f32 %v423
    %426 = vmin.xlane.f32.xlu0 %v425
    %v427 = vpop.xlane.xlu0 %426
    %vm428 = vcmp.eq.f32.partialorder %v425, %v427
    %v429 = vsel %vm428, %v424, inf
    %430 = vmin.xlane.f32.xlu0 %v429
    %v431 = vpop.xlane.xlu0 %430
    %v432 = vcvt.f32.s32 %v431
    %v433 = vcvt.f32.s32 %v427
    %v434 = vshll.u32 %v433, 16
    %v435 = vadd.s32 %v434, %v432
    %v436 = vsel %vm30, %v420, 2147483647
    %v437 = vand.u32 %v436, 65535
    %v438 = vshra.s32 %v436, 16
    %v439 = vcvt.s32.f32 %v437
    %v440 = vcvt.s32.f32 %v438
    %441 = vmin.xlane.f32.xlu0 %v440
    %v442 = vpop.xlane.xlu0 %441
    %vm443 = vcmp.eq.f32.partialorder %v440, %v442
    %v444 = vsel %vm443, %v439, inf
    %445 = vmin.xlane.f32.xlu0 %v444
    %v446 = vpop.xlane.xlu0 %445
    %v447 = vcvt.f32.s32 %v446
    %v448 = vcvt.f32.s32 %v442
    %v449 = vshll.u32 %v448, 16
    %v450 = vadd.s32 %v449, %v447
    %vm451 = vcmp.eq.s32.totalorder %v410, %v435
    %vm452 = vcmp.eq.s32.totalorder %v410, %v450
    %v453 = vsel %vm451, 1, 0
    %v454 = vsel %vm452, 1, 0
    %v455 = vcvt.s32.f32 %v453
    %v456 = vcvt.s32.f32 %v454
    %v458 = vsel %vm30, %v455, 0
    %v461 = vsel %vm30, %v456, 0
    %v464 = vsel %vm30, %v46, 0
    %v467 = vsel %vm30, %v47, 0
    %v470 = vsel %vm30, %v48, 0
    %v473 = vsel %vm30, %v49, 0
    %475 = vmatprep.subr.mxu0 0.0
    %476 = vmatpush1.xpose.msra.mxu0 %v464
    %477 = vmatprep.subr.mxu0 0.0
    %478 = vmatpush1.xpose.msra.mxu0 %v467
    %479 = vmatprep.subr.mxu0 0.0
    %480 = vmatpush1.xpose.msra.mxu0 %v470
    %481 = vmatprep.subr.mxu0 0.0
    %482 = vmatpush1.xpose.msra.mxu0 %v473
    %483 = vmatprep.subr.mxu0 0.0
    %484 = vmatpush1.xpose.msra.mxu0 0.0
    %485 = vmatprep.subr.mxu0 0.0
    %486 = vmatpush1.xpose.msra.mxu0 0.0
    %487 = vmatprep.subr.mxu0 0.0
    %488 = vmatpush1.xpose.msra.mxu0 0.0
    %489 = vmatprep.subr.mxu0 0.0
    %490 = vmatpush1.xpose.msra.mxu0 0.0
    %491 = vmatprep.subr.mxu0 0.0
    %492 = vmatpush1.xpose.msra.mxu0 0.0
    %493 = vmatprep.subr.mxu0 0.0
    %494 = vmatpush1.xpose.msra.mxu0 0.0
    %495 = vmatprep.subr.mxu0 0.0
    %496 = vmatpush1.xpose.msra.mxu0 0.0
    %497 = vmatprep.subr.mxu0 0.0
    %498 = vmatpush1.xpose.msra.mxu0 0.0
    %499 = vmatprep.subr.mxu0 0.0
    %500 = vmatpush1.xpose.msra.mxu0 0.0
    %501 = vmatprep.subr.mxu0 0.0
    %502 = vmatpush1.xpose.msra.mxu0 0.0
    %503 = vmatprep.subr.mxu0 0.0
    %504 = vmatpush1.xpose.msra.mxu0 0.0
    %505 = vmatprep.subr.mxu0 0.0
    %506 = vmatpush1.xpose.msra.mxu0 0.0
    %507 = vmatprep.subr.mxu0 0.0
    %508 = vmatpush1.xpose.msra.mxu0 0.0
    %509 = vmatprep.subr.mxu0 0.0
    %510 = vmatpush1.xpose.msra.mxu0 0.0
    %511 = vmatprep.subr.mxu0 0.0
    %512 = vmatpush1.xpose.msra.mxu0 0.0
    %513 = vmatprep.subr.mxu0 0.0
    %514 = vmatpush1.xpose.msra.mxu0 0.0
    %515 = vmatprep.subr.mxu0 0.0
    %516 = vmatpush1.xpose.msra.mxu0 0.0
    %517 = vmatprep.subr.mxu0 0.0
    %518 = vmatpush1.xpose.msra.mxu0 0.0
    %519 = vmatprep.subr.mxu0 0.0
    %520 = vmatpush1.xpose.msra.mxu0 0.0
    %521 = vmatprep.subr.mxu0 0.0
    %522 = vmatpush1.xpose.msra.mxu0 0.0
    %523 = vmatprep.subr.mxu0 0.0
    %524 = vmatpush1.xpose.msra.mxu0 0.0
    %525 = vmatprep.subr.mxu0 0.0
    %526 = vmatpush1.xpose.msra.mxu0 0.0
    %527 = vmatprep.subr.mxu0 0.0
    %528 = vmatpush1.xpose.msra.mxu0 0.0
    %529 = vmatprep.subr.mxu0 0.0
    %530 = vmatpush1.xpose.msra.mxu0 0.0
    %531 = vmatprep.subr.mxu0 0.0
    %532 = vmatpush1.xpose.msra.mxu0 0.0
    %533 = vmatprep.subr.mxu0 0.0
    %534 = vmatpush1.xpose.msra.mxu0 0.0
    %535 = vmatprep.subr.mxu0 0.0
    %536 = vmatpush1.xpose.msra.mxu0 0.0
    %537 = vmatprep.subr.mxu0 0.0
    %538 = vmatpush1.xpose.msra.mxu0 0.0
    %539 = vmatprep.mubr.f32.mxu0 0.0
    %540 = vmatmul.mubr.f32.gmra.mrb[0].mxu0 %v458
    %v541 = vpop.f32.mrb[0].mxu0
    %v542 = vadd.f32 0.0, %v541
    %v543 = vpop.f32.mrb[0].mxu0
    %544 = vmatprep.mubr.f32.mxu0 0.0
    %545 = vmatmul.mubr.f32.gmra.mrb[0].mxu0 %v461
    %v546 = vpop.f32.mrb[0].mxu0
    %v547 = vadd.f32 0.0, %v546
    %v548 = vpop.f32.mrb[0].mxu0
    %549 = vdwg.mxu0
    %550 = vst.msk [vmem:[#allocation2] sm:$0xff] %vm64, %v542
    %551 = vst.msk [vmem:[#allocation5] sm:$0xff] %vm64, %v547
    %v552 = vmul.f32 %v408, %v324
    %v553 = vsel %vm30, %v552, 0.0
    %554 = vadd.xlane.f32.xlu0 %v553
    %v555 = vpop.xlane.xlu0 %554
    %v556 = vrot.slane %v555, 4
    %v557 = vadd.f32 %v555, %v556
    %v558 = vrot.slane %v557, 2
    %v559 = vadd.f32 %v557, %v558
    %v560 = vrot.slane %v559, 1
    %v561 = vadd.f32 %v559, %v560
    %s562 = vtos %v561
    %s563 = ssub.f32 0.0, %s562
    %s564 = smul.f32 %s563, 0.125
    %s565 = scalar_lea.smem [#allocation7], 0
    %566 = sst [smem:[%s565]] %s564
    // Predicated region
    $region14: #{proto_forward.1} parent=1 // pred_check
      _
    $region15: #{proto_forward.1} parent=1 // pred_check_branch
      %568 = sbr.rel (0) target = $region17
    $region16: #{proto_forward.1} parent=1 // pred_region
      %s570 = ssub.s32 128, 128
      %571 = vsyncadd [#allocation3], %s570
      %s573 = sshll.u32 [#allocation2], 4
      %s574 = int_to_ptr.vmem [resolvable:$true] %s573
      %576 = dma.vmem_to_hbm [thread:$0]  %s574, 128, %s3, [#allocation3]
    $region17: #{proto_forward.1} parent=1 // pred_fallthru
      _
    // Predicated region
    $region18: #{proto_forward.1} parent=1 // pred_check
      _
    $region19: #{proto_forward.1} parent=1 // pred_check_branch
      %578 = sbr.rel (0) target = $region21
    $region20: #{proto_forward.1} parent=1 // pred_region
      %s580 = ssub.s32 128, 128
      %581 = vsyncadd [#allocation6], %s580
      %s583 = sshll.u32 [#allocation5], 4
      %s584 = int_to_ptr.vmem [resolvable:$true] %s583
      %586 = dma.vmem_to_hbm [thread:$0]  %s584, 128, %s4, [#allocation6]
    $region21: #{proto_forward.1} parent=1 // pred_fallthru
      _
    // Predicated region
    $region22: #{proto_forward.1} parent=1 // pred_check
      _
    $region23: #{proto_forward.1} parent=1 // pred_check_branch
      %588 = sbr.rel (0) target = $region25
    $region24: #{proto_forward.1} parent=1 // pred_region
      %s590 = ssub.s32 16, 16
      %591 = vsyncadd [#allocation4], %s590
      %594 = dma.smem_to_hbm [#allocation7], 16, %s5, [#allocation4]
    $region25: #{proto_forward.1} parent=1 // pred_fallthru
      _
    // Predicated region
    $region26: #{proto_forward.1} parent=1 // pred_check
      _
    $region27: #{proto_forward.1} parent=1 // pred_check_branch
      %596 = sbr.rel (0) target = $region29
    $region28: #{proto_forward.1} parent=1 // pred_region
      %597 = dma.done [#allocation3], 128
    $region29: #{proto_forward.1} parent=1 // pred_fallthru
      _
    // Predicated region
    $region30: #{proto_forward.1} parent=1 // pred_check
      _
    $region31: #{proto_forward.1} parent=1 // pred_check_branch
      %599 = sbr.rel (0) target = $region33
    $region32: #{proto_forward.1} parent=1 // pred_region
      %600 = dma.done [#allocation6], 128
    $region33: #{proto_forward.1} parent=1 // pred_fallthru
      _
    // Predicated region
    $region34: #{proto_forward.1} parent=1 // pred_check
      _
    $region35: #{proto_forward.1} parent=1 // pred_check_branch
      %602 = sbr.rel (0) target = $region37
    $region36: #{proto_forward.1} parent=1 // pred_region
      %603 = dma.done [#allocation4], 16
    $region37: #{proto_forward.1} parent=1 // pred_fallthru
      _
    %604 = sfence
    %605 = vsyncpa [#allocation3], 1
    %606 = vsyncpa [#allocation6], 1
    %607 = vsyncpa [#allocation4], 1

</llo_original>
